<compile_context>
chip_gen: v7x
topology: tpu7x:2x2x1
jax: 0.10.0
libtpu: 0.0.40
codegen_flags: <defaults>
</compile_context>

<pallas_src>
import numpy as np
import jax
import jax.numpy as jnp
from jax.experimental import pallas as pl
from jax.experimental.pallas import tpu as pltpu


def _largest_divisor_leq(n, cap):
    """Largest divisor of n that is <= cap (>= 1)."""
    cap = int(max(1, min(n, cap)))
    for t in range(cap, 0, -1):
        if n % t == 0:
            return t
    return 1


def _make_split_kernel(windows):
    """Kernel copying each static window of the split axis into its output ref."""
    def kernel(x_ref, *o_refs):
        for (start, ln), o_ref in zip(windows, o_refs):
            # Static slice along the (sublane) split axis of the VMEM tile.
            o_ref[...] = x_ref[:, start:start + ln, :]
    return kernel


def pallas_split(x, size, dim):
    """Equivalent of torch.split(x, size, dim): returns a tuple of chunks.

    `size` may be an int (chunk size, last chunk possibly smaller) or a sequence
    of ints (explicit chunk sizes), matching torch.split semantics.
    """
    ndim = x.ndim
    dim = dim % ndim
    d = x.shape[dim]

    # Chunk lengths, torch.split semantics.
    if isinstance(size, (int, np.integer)):
        size = int(size)
        n_full = d // size
        lengths = [size] * n_full
        if d % size:
            lengths.append(d % size)
    else:
        lengths = [int(s) for s in size]
        assert sum(lengths) == d, "split sizes must sum to dim size"

    starts = [0]
    for ln in lengths[:-1]:
        starts.append(starts[-1] + ln)
    windows = list(zip(starts, lengths))

    pre = int(np.prod(x.shape[:dim], dtype=np.int64)) if dim > 0 else 1
    post = int(np.prod(x.shape[dim + 1:], dtype=np.int64)) if dim < ndim - 1 else 1
    x3 = x.reshape(pre, d, post)

    itemsize = jnp.dtype(x.dtype).itemsize
    row_bytes = max(1, d * post * itemsize)
    # ~2 MiB input tile per grid step; with double buffering of input + outputs the
    # per-step VMEM footprint stays ~8 MiB, well under the 32 MiB scoped limit.
    target_tile_bytes = 2 << 20
    tile_pre = _largest_divisor_leq(pre, max(1, target_tile_bytes // row_bytes))
    grid = (pre // tile_pre,)

    out_shape = tuple(
        jax.ShapeDtypeStruct((pre, ln, post), x.dtype) for ln in lengths
    )
    out_specs = tuple(
        pl.BlockSpec((tile_pre, ln, post), lambda i: (i, 0, 0)) for ln in lengths
    )

    total_bytes = pre * d * post * itemsize

    outs = pl.pallas_call(
        _make_split_kernel(windows),
        out_shape=out_shape,
        grid=grid,
        in_specs=[pl.BlockSpec((tile_pre, d, post), lambda i: (i, 0, 0))],
        out_specs=out_specs,
        compiler_params=pltpu.CompilerParams(
            dimension_semantics=("parallel",),
            vmem_limit_bytes=32 * 1024 * 1024,
        ),
        cost_estimate=pl.CostEstimate(
            flops=0, transcendentals=0, bytes_accessed=2 * total_bytes
        ),
    )(x3)

    if not isinstance(outs, (tuple, list)):
        outs = (outs,)

    return tuple(
        o.reshape(x.shape[:dim] + (ln,) + x.shape[dim + 1:])
        for o, ln in zip(outs, lengths)
    )


if __name__ == "__main__":
    key = jax.random.PRNGKey(0)
    # Module config (synthetic, deterministic): split size=6 along dim=2.
    split_size = 6
    split_dim = 2

    x = jax.random.normal(key, (2, 4, 16, 16), dtype=jnp.float32)

    chunks = pallas_split(x, split_size, split_dim)
    chunks = jax.block_until_ready(chunks)

    # Reference: plain JAX slicing (mirrors torch.split exactly).
    d = x.shape[split_dim]
    ref_starts = list(range(0, d, split_size))
    ref = tuple(
        jax.lax.slice_in_dim(x, st, min(st + split_size, d), axis=split_dim)
        for st in ref_starts
    )

    assert len(chunks) == len(ref)
    for c, r in zip(chunks, ref):
        assert c.shape == r.shape, (c.shape, r.shape)
        assert c.dtype == r.dtype
        np.testing.assert_array_equal(np.asarray(c), np.asarray(r))

    print("KERNEL_OK")
</pallas_src>

<mosaic_0001>
module attributes {stable_mosaic.version = 11 : i64} {
  func.func @kernel(%arg0: i32, %arg1: memref<8x16x16xf32, #tpu.memory_space<vmem>>, %arg2: memref<8x6x16xf32, #tpu.memory_space<vmem>>, %arg3: memref<8x6x16xf32, #tpu.memory_space<vmem>>, %arg4: memref<8x4x16xf32, #tpu.memory_space<vmem>>) attributes {dimension_semantics = [#tpu.dimension_semantics<parallel>], iteration_bounds = array<i64: 1>, scalar_prefetch = 0 : i64, scratch_operands = 0 : i64, tpu.core_type = #tpu.core_type<tc>, window_params = [{transform_indices = @transform_0, window_bounds = array<i64: 8, 16, 16>}, {transform_indices = @transform_1, window_bounds = array<i64: 8, 6, 16>}, {transform_indices = @transform_2, window_bounds = array<i64: 8, 6, 16>}, {transform_indices = @transform_3, window_bounds = array<i64: 8, 4, 16>}]} {
    %c0 = arith.constant 0 : index
    %c0_0 = arith.constant 0 : index
    %c0_1 = arith.constant 0 : index
    %0 = vector.load %arg1[%c0, %c0_0, %c0_1] : memref<8x16x16xf32, #tpu.memory_space<vmem>>, vector<8x6x16xf32>
    %c0_2 = arith.constant 0 : index
    %c0_3 = arith.constant 0 : index
    %c0_4 = arith.constant 0 : index
    %1 = vector.load %arg2[%c0_2, %c0_3, %c0_4] : memref<8x6x16xf32, #tpu.memory_space<vmem>>, vector<8x6x16xf32>
    tpu.vector_store %arg2[%c0_2, %c0_3, %c0_4], %0 {strides = array<i32>} : memref<8x6x16xf32, #tpu.memory_space<vmem>>, vector<8x6x16xf32>,
    %c0_5 = arith.constant 0 : index
    %c6 = arith.constant 6 : index
    %c0_6 = arith.constant 0 : index
    %2 = vector.load %arg1[%c0_5, %c6, %c0_6] : memref<8x16x16xf32, #tpu.memory_space<vmem>>, vector<8x6x16xf32>
    %c0_7 = arith.constant 0 : index
    %c0_8 = arith.constant 0 : index
    %c0_9 = arith.constant 0 : index
    %3 = vector.load %arg3[%c0_7, %c0_8, %c0_9] : memref<8x6x16xf32, #tpu.memory_space<vmem>>, vector<8x6x16xf32>
    tpu.vector_store %arg3[%c0_7, %c0_8, %c0_9], %2 {strides = array<i32>} : memref<8x6x16xf32, #tpu.memory_space<vmem>>, vector<8x6x16xf32>,
    %c0_10 = arith.constant 0 : index
    %c12 = arith.constant 12 : index
    %c0_11 = arith.constant 0 : index
    %4 = vector.load %arg1[%c0_10, %c12, %c0_11] : memref<8x16x16xf32, #tpu.memory_space<vmem>>, vector<8x4x16xf32>
    %c0_12 = arith.constant 0 : index
    %c0_13 = arith.constant 0 : index
    %c0_14 = arith.constant 0 : index
    %5 = vector.load %arg4[%c0_12, %c0_13, %c0_14] : memref<8x4x16xf32, #tpu.memory_space<vmem>>, vector<8x4x16xf32>
    tpu.vector_store %arg4[%c0_12, %c0_13, %c0_14], %4 {strides = array<i32>} : memref<8x4x16xf32, #tpu.memory_space<vmem>>, vector<8x4x16xf32>,
    return
  }
  func.func @transform_0(%arg0: i32) -> (i32, i32, i32) {
    %c0_i32 = arith.constant 0 : i32
    %c0_i32_0 = arith.constant 0 : i32
    %c0_i32_1 = arith.constant 0 : i32
    return %arg0, %c0_i32, %c0_i32_0 : i32, i32, i32
  }
  func.func @transform_1(%arg0: i32) -> (i32, i32, i32) {
    %c0_i32 = arith.constant 0 : i32
    %c0_i32_0 = arith.constant 0 : i32
    %c0_i32_1 = arith.constant 0 : i32
    return %arg0, %c0_i32, %c0_i32_0 : i32, i32, i32
  }
  func.func @transform_2(%arg0: i32) -> (i32, i32, i32) {
    %c0_i32 = arith.constant 0 : i32
    %c0_i32_0 = arith.constant 0 : i32
    %c0_i32_1 = arith.constant 0 : i32
    return %arg0, %c0_i32, %c0_i32_0 : i32, i32, i32
  }
  func.func @transform_3(%arg0: i32) -> (i32, i32, i32) {
    %c0_i32 = arith.constant 0 : i32
    %c0_i32_0 = arith.constant 0 : i32
    %c0_i32_1 = arith.constant 0 : i32
    return %arg0, %c0_i32, %c0_i32_0 : i32, i32, i32
  }
}

</mosaic_0001>

<llo_original>
// kernel: tpu_custom_call.1
$region0: #{tpu_custom_call.1}
  #allocation0 [shape = 'u32[]', space=smem, size = 0x4, offset = 0x4, fixed_abs, tag = 'smem constant byte address 0x4 - core index']
  #allocation1 [shape = 'u32[144,128]{1,0:T(1,128)}', space=vmem, size = 0x12000, scoped, tag = 'internal scratch']
  %s0 = inlined_call_operand.hbm [shape: f32[8,16,16], index: 0, kind: input, shape index: {}]
  %s1 = inlined_call_operand.vmem [shape: f32[8,6,16], index: 1, kind: output, shape index: {0}]
  %s2 = inlined_call_operand.vmem [shape: f32[8,6,16], index: 2, kind: output, shape index: {1}]
  %s3 = inlined_call_operand.hbm [shape: f32[8,4,16], index: 3, kind: output, shape index: {2}]
  %4 = xla_tuple %s1, %s2, %s3
  %s5 = sld [smem:[#allocation0]]
  $region34: #{tpu_custom_call.1} parent=0
    _
  %s7 = ssub.s32 1, %s5
  %s8 = scalar_select 0, %s7, %s5
  $region1: #{tpu_custom_call.1} parent=0
    #allocation2 [shape = 'u8[65536]{0}', space=vmem, size = 0x10000, scoped, tag = 'input window, operand 0, single buffered']
    #allocation3 [shape = 's32[1]{0}', space=sflag, size = 0x4, scoped, tag = 'scoped memory for tpu_custom_call.1']
    #allocation4 [shape = 's32[1]{0}', space=sflag, size = 0x4, scoped, tag = 'scoped memory for tpu_custom_call.1']
    #allocation5 [shape = 'u8[16384]{0}', space=vmem, size = 0x4000, scoped, tag = 'output window, operand 2, single buffered']
    %9 = vsyncpa [#allocation3], 0
    %10 = vsyncpa [#allocation4], 0
    // Predicated region
    $region2: #{tpu_custom_call.1} parent=1 // pred_check
      _
    $region3: #{tpu_custom_call.1} parent=1 // pred_check_branch
      %12 = sbr.rel (0) target = $region5
    $region4: #{tpu_custom_call.1} parent=1 // pred_region
      %s14 = ssub.s32 2048, 2048
      %15 = vsyncadd [#allocation3], %s14
      %s16 = sshll.u32 [#allocation2], 4
      %s17 = int_to_ptr.vmem [resolvable:$true] %s16
      %22 = dma.hbm_to_vmem [thread:$0]  %s0, 2048, %s17, [#allocation3], 128, 128, 8
    $region5: #{tpu_custom_call.1} parent=1 // pred_fallthru
      _
    // Predicated region
    $region6: #{tpu_custom_call.1} parent=1 // pred_check
      _
    $region7: #{tpu_custom_call.1} parent=1 // pred_check_branch
      %24 = sbr.rel (0) target = $region9
    $region8: #{tpu_custom_call.1} parent=1 // pred_region
      %25 = dma.done [#allocation3], 2048
    $region9: #{tpu_custom_call.1} parent=1 // pred_fallthru
      _
    %v26 = vld [vmem:[#allocation2] sm:$0x3f]
    %v27 = vld [vmem:[#allocation2 + $0x10] sm:$0x3f]
    %v28 = vld [vmem:[#allocation2 + $0x20] sm:$0x3f]
    %v29 = vld [vmem:[#allocation2 + $0x30] sm:$0x3f]
    %v30 = vld [vmem:[#allocation2 + $0x40] sm:$0x3f]
    %v31 = vld [vmem:[#allocation2 + $0x50] sm:$0x3f]
    %v32 = vld [vmem:[#allocation2 + $0x60] sm:$0x3f]
    %v33 = vld [vmem:[#allocation2 + $0x70] sm:$0x3f]
    %vm34 = vcmask 128000
    %35 = vst.msk [vmem:[%s1] sm:$0x3f] %vm34, %v26
    %36 = vst.msk [vmem:[%s1 + $0x8] sm:$0x3f] %vm34, %v27
    %37 = vst.msk [vmem:[%s1 + $0x10] sm:$0x3f] %vm34, %v28
    %38 = vst.msk [vmem:[%s1 + $0x18] sm:$0x3f] %vm34, %v29
    %39 = vst.msk [vmem:[%s1 + $0x20] sm:$0x3f] %vm34, %v30
    %40 = vst.msk [vmem:[%s1 + $0x28] sm:$0x3f] %vm34, %v31
    %41 = vst.msk [vmem:[%s1 + $0x30] sm:$0x3f] %vm34, %v32
    %42 = vst.msk [vmem:[%s1 + $0x38] sm:$0x3f] %vm34, %v33
    %v43 = vld [vmem:[#allocation2 + $0x6] sm:$0x3f]
    %v44 = vld [vmem:[#allocation2 + $0x16] sm:$0x3f]
    %v45 = vld [vmem:[#allocation2 + $0x26] sm:$0x3f]
    %v46 = vld [vmem:[#allocation2 + $0x36] sm:$0x3f]
    %v47 = vld [vmem:[#allocation2 + $0x46] sm:$0x3f]
    %v48 = vld [vmem:[#allocation2 + $0x56] sm:$0x3f]
    %v49 = vld [vmem:[#allocation2 + $0x66] sm:$0x3f]
    %v50 = vld [vmem:[#allocation2 + $0x76] sm:$0x3f]
    %51 = vst.msk [vmem:[%s2] sm:$0x3f] %vm34, %v43
    %52 = vst.msk [vmem:[%s2 + $0x8] sm:$0x3f] %vm34, %v44
    %53 = vst.msk [vmem:[%s2 + $0x10] sm:$0x3f] %vm34, %v45
    %54 = vst.msk [vmem:[%s2 + $0x18] sm:$0x3f] %vm34, %v46
    %55 = vst.msk [vmem:[%s2 + $0x20] sm:$0x3f] %vm34, %v47
    %56 = vst.msk [vmem:[%s2 + $0x28] sm:$0x3f] %vm34, %v48
    %57 = vst.msk [vmem:[%s2 + $0x30] sm:$0x3f] %vm34, %v49
    %58 = vst.msk [vmem:[%s2 + $0x38] sm:$0x3f] %vm34, %v50
    %v59 = vld [vmem:[#allocation2 + $0xc] sm:$0xf]
    %v60 = vld [vmem:[#allocation2 + $0x1c] sm:$0xf]
    %v61 = vld [vmem:[#allocation2 + $0x2c] sm:$0xf]
    %v62 = vld [vmem:[#allocation2 + $0x3c] sm:$0xf]
    %v63 = vld [vmem:[#allocation2 + $0x4c] sm:$0xf]
    %v64 = vld [vmem:[#allocation2 + $0x5c] sm:$0xf]
    %v65 = vld [vmem:[#allocation2 + $0x6c] sm:$0xf]
    %v66 = vld [vmem:[#allocation2 + $0x7c] sm:$0xf]
    %vm67 = vcmask 125952
    %68 = vst.msk [vmem:[#allocation5] sm:$0xf] %vm67, %v59
    %69 = vst.msk [vmem:[#allocation5 + $0x4] sm:$0xf] %vm67, %v60
    %70 = vst.msk [vmem:[#allocation5 + $0x8] sm:$0xf] %vm67, %v61
    %71 = vst.msk [vmem:[#allocation5 + $0xc] sm:$0xf] %vm67, %v62
    %72 = vst.msk [vmem:[#allocation5 + $0x10] sm:$0xf] %vm67, %v63
    %73 = vst.msk [vmem:[#allocation5 + $0x14] sm:$0xf] %vm67, %v64
    %74 = vst.msk [vmem:[#allocation5 + $0x18] sm:$0xf] %vm67, %v65
    %75 = vst.msk [vmem:[#allocation5 + $0x1c] sm:$0xf] %vm67, %v66
    // Predicated region
    $region10: #{tpu_custom_call.1} parent=1 // pred_check
      _
    $region11: #{tpu_custom_call.1} parent=1 // pred_check_branch
      %77 = sbr.rel (0) target = $region13
    $region12: #{tpu_custom_call.1} parent=1 // pred_region
      _
    $region13: #{tpu_custom_call.1} parent=1 // pred_fallthru
      _
    // Predicated region
    $region14: #{tpu_custom_call.1} parent=1 // pred_check
      _
    $region15: #{tpu_custom_call.1} parent=1 // pred_check_branch
      %79 = sbr.rel (0) target = $region17
    $region16: #{tpu_custom_call.1} parent=1 // pred_region
      _
    $region17: #{tpu_custom_call.1} parent=1 // pred_fallthru
      _
    // Predicated region
    $region18: #{tpu_custom_call.1} parent=1 // pred_check
      _
    $region19: #{tpu_custom_call.1} parent=1 // pred_check_branch
      %81 = sbr.rel (0) target = $region21
    $region20: #{tpu_custom_call.1} parent=1 // pred_region
      %s83 = ssub.s32 512, 512
      %84 = vsyncadd [#allocation4], %s83
      %s85 = sshll.u32 [#allocation5], 4
      %s86 = int_to_ptr.vmem [resolvable:$true] %s85
      %91 = dma.vmem_to_hbm [thread:$0]  %s86, 512, %s3, [#allocation4], 64, 64, 4
    $region21: #{tpu_custom_call.1} parent=1 // pred_fallthru
      _
    // Predicated region
    $region22: #{tpu_custom_call.1} parent=1 // pred_check
      _
    $region23: #{tpu_custom_call.1} parent=1 // pred_check_branch
      %93 = sbr.rel (0) target = $region25
    $region24: #{tpu_custom_call.1} parent=1 // pred_region
      _
    $region25: #{tpu_custom_call.1} parent=1 // pred_fallthru
      _
    // Predicated region
    $region26: #{tpu_custom_call.1} parent=1 // pred_check
      _
    $region27: #{tpu_custom_call.1} parent=1 // pred_check_branch
      %95 = sbr.rel (0) target = $region29
    $region28: #{tpu_custom_call.1} parent=1 // pred_region
      _
    $region29: #{tpu_custom_call.1} parent=1 // pred_fallthru
      _
    // Predicated region
    $region30: #{tpu_custom_call.1} parent=1 // pred_check
      _
    $region31: #{tpu_custom_call.1} parent=1 // pred_check_branch
      %97 = sbr.rel (0) target = $region33
    $region32: #{tpu_custom_call.1} parent=1 // pred_region
      %98 = dma.done [#allocation4], 512
    $region33: #{tpu_custom_call.1} parent=1 // pred_fallthru
      _
    %99 = vsyncpa [#allocation3], 1
    %100 = vsyncpa [#allocation4], 1

</llo_original>
